<compile_context>
chip_gen: v7x
topology: tpu7x:2x2x1
jax: 0.10.0
libtpu: 0.0.40
codegen_flags: <defaults>
</compile_context>

<pallas_src>
import functools

import jax
import jax.numpy as jnp
import numpy as np
from jax import lax
from jax.experimental import pallas as pl
from jax.experimental.pallas import tpu as pltpu

# Module configuration.
N_TILES = 4
N_AUX = 2
BIN_CHAN = False
N_HID = 32
C_TILES = N_TILES + int(BIN_CHAN)   # channels of the external input x (4)
C_IN = C_TILES + N_AUX              # conv-1 input channels (6)
C_OUT = N_TILES + N_AUX             # conv-3 output channels (6)
C_PAD = 8                           # per-tap channel padding (sublane aligned)
C_OUT_PAD = 8                       # fused conv-3 head rows (sublane aligned)
K_TAPS = 9                          # 3x3 taps


# ----------------------------------------------------------------------------
# Pallas kernel: one NCA step for B_blk batch elements.
# ----------------------------------------------------------------------------
def _nca_kernel(x_ref, aux_ref, mask_ref, w1_ref, b1_ref, w2_ref, b2_ref,
                w3_ref, b3_ref, o_tiles_ref, o_aux_ref, *, H, W, B_blk):
    S = H * W

    # ---- im2col in registers: tap (dy, dx) == plane lane-rolled by dy*W+dx --
    # Valid output lanes never read wrapped data; wrapped lanes only land in
    # positions the wrapper discards.  Rows 6:8 are finite filler hit by zero
    # weight columns, so they contribute exactly 0.
    per_elem = []
    for b in range(B_blk):
        x_b = x_ref[b]                                          # (C_TILES, S)
        a_b = aux_ref[b]                                        # (N_AUX, S)
        xin8 = jnp.concatenate([x_b, a_b, x_b[:C_PAD - C_IN]], axis=0)  # (8, S)
        taps = []
        for dy in range(3):
            for dx in range(3):
                off = dy * W + dx
                taps.append(xin8 if off == 0
                            else pltpu.roll(xin8, S - off, axis=1))
        per_elem.append(jnp.concatenate(taps, axis=0))          # (72, S)
    patches = per_elem[0] if B_blk == 1 else jnp.concatenate(per_elem, axis=1)

    # ---- conv stack as (out_ch, B_blk*S) matmuls; biases broadcast on lanes -
    h1 = jnp.dot(w1_ref[...], patches, preferred_element_type=jnp.float32)
    h1 = jnp.maximum(h1 + b1_ref[...], 0.0)                     # (N_HID, B*S)
    h2 = jnp.dot(w2_ref[...], h1, preferred_element_type=jnp.float32)
    h2 = jnp.maximum(h2 + b2_ref[...], 0.0)                     # (N_HID, B*S)
    y = jax.nn.sigmoid(
        jnp.dot(w3_ref[...], h2, preferred_element_type=jnp.float32)
        + b3_ref[...])                                          # (8, B*S)

    # ---- lane-dense stores -------------------------------------------------
    # tiles: full flat (N_TILES, S) block; wrapper compacts the valid window.
    # aux: fused F.pad == roll by W+1 lanes (XLU) * precomputed interior mask.
    mask = mask_ref[...]                                        # (1, S)
    for b in range(B_blk):
        yb = y[:, b * S:(b + 1) * S]                            # (8, S)
        o_tiles_ref[b] = yb[:N_TILES]
        o_aux_ref[b] = pltpu.roll(yb[N_TILES:N_TILES + N_AUX],
                                  W + 1, axis=1) * mask


# ----------------------------------------------------------------------------
# pallas_call wrapper (flat spatial layout in / out).
# ----------------------------------------------------------------------------
def _pick_bblk(B):
    """Largest divisor of B that still leaves >=2 grid steps (cap 8)."""
    if B <= 1:
        return 1
    cap = min(8, max(1, B // 2))
    for d in range(cap, 0, -1):
        if B % d == 0:
            return d
    return 1


@functools.partial(jax.jit, static_argnames=("H", "W"))
def _nca_step(x_flat, aux_flat, mask, w1p, b1, w2, b2, w3f, b3f, *, H, W):
    B = x_flat.shape[0]
    S = H * W
    B_blk = _pick_bblk(B)
    n_steps = B // B_blk

    flops = 2 * B * S * (K_TAPS * C_PAD * N_HID + N_HID * N_HID
                         + N_HID * C_OUT_PAD)
    bytes_accessed = 4 * (B * S * (C_TILES + 2 * N_AUX + N_TILES)
                          + w1p.size + w2.size + w3f.size
                          + b1.size + b2.size + b3f.size + mask.size)

    bcast = lambda i: (0, 0)
    batched = lambda i: (i, 0, 0)

    return pl.pallas_call(
        functools.partial(_nca_kernel, H=H, W=W, B_blk=B_blk),
        out_shape=[jax.ShapeDtypeStruct((B, N_TILES, S), jnp.float32),
                   jax.ShapeDtypeStruct((B, N_AUX, S), jnp.float32)],
        grid=(n_steps,),
        in_specs=[
            pl.BlockSpec((B_blk, C_TILES, S), batched),
            pl.BlockSpec((B_blk, N_AUX, S), batched),
            pl.BlockSpec((1, S), bcast),                 # interior mask
            pl.BlockSpec((N_HID, K_TAPS * C_PAD), bcast),
            pl.BlockSpec((N_HID, 1), bcast),
            pl.BlockSpec((N_HID, N_HID), bcast),
            pl.BlockSpec((N_HID, 1), bcast),
            pl.BlockSpec((C_OUT_PAD, N_HID), bcast),
            pl.BlockSpec((C_OUT_PAD, 1), bcast),
        ],
        out_specs=[
            pl.BlockSpec((B_blk, N_TILES, S), batched),
            pl.BlockSpec((B_blk, N_AUX, S), batched),
        ],
        compiler_params=pltpu.CompilerParams(
            dimension_semantics=("parallel",)),
        cost_estimate=pl.CostEstimate(
            flops=flops, transcendentals=B * S * C_OUT_PAD,
            bytes_accessed=bytes_accessed),
    )(x_flat, aux_flat, mask, w1p, b1, w2, b2, w3f, b3f)


# ----------------------------------------------------------------------------
# Parameter init (deterministic, orthogonal conv weights like _init_weights).
# Kernel-ready layouts: fused/padded conv-1 weight (N_HID, 72), fused conv-3
# head padded to (8, N_HID), biases as (out, 1) columns.  w1_oihw / w3 / b3
# are kept only for the pure-JAX reference.
# ----------------------------------------------------------------------------
def init_params(key):
    k1, k2, k3, kb1, kb2, kb3 = jax.random.split(key, 6)
    ortho = jax.nn.initializers.orthogonal()

    # torch orthogonal_ on (O, I, 3, 3) == orthogonal (O, I*9) matrix.
    w1_oihw = ortho(k1, (N_HID, C_IN * 9), jnp.float32).reshape(N_HID, C_IN, 3, 3)
    # fused, sublane-padded conv weight: column ((dy*3+dx)*8 + c) <- w1[o,c,dy,dx]
    w1_tap = jnp.transpose(w1_oihw, (0, 2, 3, 1))               # (O, 3, 3, C_IN)
    w1_tap = jnp.pad(w1_tap, ((0, 0), (0, 0), (0, 0), (0, C_PAD - C_IN)))
    w1p = w1_tap.reshape(N_HID, K_TAPS * C_PAD)                 # (32, 72)

    w2 = ortho(k2, (N_HID, N_HID), jnp.float32)                 # (out, in)
    w3 = ortho(k3, (C_OUT, N_HID), jnp.float32)                 # (out, in)

    def _bias(k, fan_in, n):  # torch Conv2d default bias init (deterministic)
        bound = 1.0 / float(fan_in) ** 0.5
        return jax.random.uniform(k, (n, 1), jnp.float32, -bound, bound)

    b1 = _bias(kb1, C_IN * 9, N_HID)
    b2 = _bias(kb2, N_HID, N_HID)
    b3 = _bias(kb3, N_HID, C_OUT)

    # fused conv-3 head, zero-padded to 8 output rows (rows 6:8 never read).
    w3f = jnp.pad(w3, ((0, C_OUT_PAD - C_OUT), (0, 0)))         # (8, 32)
    b3f = jnp.pad(b3, ((0, C_OUT_PAD - C_OUT), (0, 0)))         # (8, 1)

    return dict(w1_oihw=w1_oihw, w1p=w1p, b1=b1, w2=w2, b2=b2,
                w3=w3, b3=b3, w3f=w3f, b3f=b3f)


@functools.lru_cache(maxsize=None)
def _interior_mask(H, W):
    """(1, H*W) float32 mask of the 1-pixel-in interior (the F.pad fusion)."""
    hh, ww = np.meshgrid(np.arange(H), np.arange(W), indexing="ij")
    m = ((hh >= 1) & (hh <= H - 2) & (ww >= 1) & (ww <= W - 2))
    return jnp.asarray(m.reshape(1, H * W).astype(np.float32))


# ----------------------------------------------------------------------------
# Forward wrapper reproducing NCA.forward semantics (NCHW in / NCHW out).
# The module's `last_aux` state is threaded explicitly (functional style).
# Wrapper-side work is trailing-dim reshapes (free) + one static slice.
# ----------------------------------------------------------------------------
def nca_forward(params, x_nchw, last_aux=None):
    B, c, H, W = x_nchw.shape
    assert c == C_TILES
    if last_aux is None:
        # torch zero-inits the aux state on the first call
        last_aux = jnp.zeros((B, N_AUX, H, W), jnp.float32)
    x_flat = x_nchw.reshape(B, C_TILES, H * W)       # trailing-dim merge: free
    aux_flat = last_aux.reshape(B, N_AUX, H * W)     # free
    tiles_flat, aux_new = _nca_step(x_flat, aux_flat, _interior_mask(H, W),
                                    params["w1p"], params["b1"],
                                    params["w2"], params["b2"],
                                    params["w3f"], params["b3f"], H=H, W=W)
    tiles = tiles_flat.reshape(B, N_TILES, H, W)[:, :, :H - 2, :W - 2]
    return tiles, aux_new.reshape(B, N_AUX, H, W)


# ----------------------------------------------------------------------------
# Pure-JAX reference (for the correctness assert only).
# ----------------------------------------------------------------------------
def nca_forward_ref(params, x_nchw, last_aux=None):
    B, _, H, W = x_nchw.shape
    if last_aux is None:
        last_aux = jnp.zeros((B, N_AUX, H, W), jnp.float32)
    x_in = jnp.concatenate([x_nchw, last_aux], axis=1)
    h = lax.conv_general_dilated(x_in, params["w1_oihw"], (1, 1), "VALID",
                                 dimension_numbers=("NCHW", "OIHW", "NCHW"))
    h = jnp.maximum(h + params["b1"].reshape(1, -1, 1, 1), 0.0)
    h = jnp.einsum("oc,bchw->bohw", params["w2"], h) + params["b2"].reshape(1, -1, 1, 1)
    h = jnp.maximum(h, 0.0)
    h = jnp.einsum("oc,bchw->bohw", params["w3"], h) + params["b3"].reshape(1, -1, 1, 1)
    out = jax.nn.sigmoid(h)
    new_aux = jnp.pad(out[:, -N_AUX:], ((0, 0), (0, 0), (1, 1), (1, 1)))
    return out[:, :N_TILES], new_aux


if __name__ == "__main__":
    key = jax.random.PRNGKey(0)
    pkey, xkey = jax.random.split(key)
    params = init_params(pkey)

    B, H, W = 2, 16, 16
    x = jax.random.uniform(xkey, (B, C_TILES, H, W), jnp.float32)

    # Step 1: last_aux is None -> zeros, like the torch module.
    out1, aux1 = nca_forward(params, x, None)
    jax.block_until_ready((out1, aux1))

    # Step 2: feed the updated aux state back in (stateful NCA rollout).
    x2 = jax.random.uniform(jax.random.PRNGKey(1), (B, C_TILES, H, W), jnp.float32)
    out2, aux2 = nca_forward(params, x2, aux1)
    jax.block_until_ready((out2, aux2))

    # Validate against the pure-JAX reference.
    r1, ra1 = nca_forward_ref(params, x, None)
    r2, ra2 = nca_forward_ref(params, x2, ra1)
    assert out1.shape == (B, N_TILES, H - 2, W - 2)
    assert aux1.shape == (B, N_AUX, H, W)
    assert jnp.allclose(out1, r1, atol=2e-5), "step-1 tiles mismatch"
    assert jnp.allclose(aux1, ra1, atol=2e-5), "step-1 aux mismatch"
    assert jnp.allclose(out2, r2, atol=2e-5), "step-2 tiles mismatch"
    assert jnp.allclose(aux2, ra2, atol=2e-5), "step-2 aux mismatch"

    # Also exercise the lane-stacked batched path (B=4 -> B_blk=2, grid=(2,)).
    x4 = jax.random.uniform(jax.random.PRNGKey(2), (4, C_TILES, H, W), jnp.float32)
    out4, aux4 = nca_forward(params, x4, None)
    jax.block_until_ready((out4, aux4))
    r4, ra4 = nca_forward_ref(params, x4, None)
    assert jnp.allclose(out4, r4, atol=2e-5), "batched tiles mismatch"
    assert jnp.allclose(aux4, ra4, atol=2e-5), "batched aux mismatch"

    print("KERNEL_OK")
</pallas_src>

<mosaic_0001>
module attributes {stable_mosaic.version = 11 : i64} {
  func.func @_nca_kernel(%arg0: i32, %arg1: memref<1x4x256xf32, #tpu.memory_space<vmem>>, %arg2: memref<1x2x256xf32, #tpu.memory_space<vmem>>, %arg3: memref<1x256xf32, #tpu.memory_space<vmem>>, %arg4: memref<32x72xf32, #tpu.memory_space<vmem>>, %arg5: memref<32x1xf32, #tpu.memory_space<vmem>>, %arg6: memref<32x32xf32, #tpu.memory_space<vmem>>, %arg7: memref<32x1xf32, #tpu.memory_space<vmem>>, %arg8: memref<8x32xf32, #tpu.memory_space<vmem>>, %arg9: memref<8x1xf32, #tpu.memory_space<vmem>>, %arg10: memref<1x4x256xf32, #tpu.memory_space<vmem>>, %arg11: memref<1x2x256xf32, #tpu.memory_space<vmem>>) attributes {dimension_semantics = [#tpu.dimension_semantics<parallel>], iteration_bounds = array<i64: 2>, scalar_prefetch = 0 : i64, scratch_operands = 0 : i64, tpu.core_type = #tpu.core_type<tc>, window_params = [{transform_indices = @transform_0, window_bounds = array<i64: 1, 4, 256>}, {transform_indices = @transform_1, window_bounds = array<i64: 1, 2, 256>}, {pipeline_mode = #tpu.pipeline_mode<synchronous>, transform_indices = @transform_2, window_bounds = array<i64: 1, 256>}, {pipeline_mode = #tpu.pipeline_mode<synchronous>, transform_indices = @transform_3, window_bounds = array<i64: 32, 72>}, {pipeline_mode = #tpu.pipeline_mode<synchronous>, transform_indices = @transform_4, window_bounds = array<i64: 32, 1>}, {pipeline_mode = #tpu.pipeline_mode<synchronous>, transform_indices = @transform_5, window_bounds = array<i64: 32, 32>}, {pipeline_mode = #tpu.pipeline_mode<synchronous>, transform_indices = @transform_6, window_bounds = array<i64: 32, 1>}, {pipeline_mode = #tpu.pipeline_mode<synchronous>, transform_indices = @transform_7, window_bounds = array<i64: 8, 32>}, {pipeline_mode = #tpu.pipeline_mode<synchronous>, transform_indices = @transform_8, window_bounds = array<i64: 8, 1>}, {transform_indices = @transform_9, window_bounds = array<i64: 1, 4, 256>}, {transform_indices = @transform_10, window_bounds = array<i64: 1, 2, 256>}]} {
    %c0 = arith.constant 0 : index
    %c0_0 = arith.constant 0 : index
    %c0_1 = arith.constant 0 : index
    %0 = vector.load %arg1[%c0, %c0_0, %c0_1] : memref<1x4x256xf32, #tpu.memory_space<vmem>>, vector<1x4x256xf32>
    %1 = vector.shape_cast %0 : vector<1x4x256xf32> to vector<4x256xf32>
    %c0_2 = arith.constant 0 : index
    %c0_3 = arith.constant 0 : index
    %c0_4 = arith.constant 0 : index
    %2 = vector.load %arg2[%c0_2, %c0_3, %c0_4] : memref<1x2x256xf32, #tpu.memory_space<vmem>>, vector<1x2x256xf32>
    %3 = vector.shape_cast %2 : vector<1x2x256xf32> to vector<2x256xf32>
    %4 = vector.extract_strided_slice %1 {offsets = [0, 0], sizes = [2, 256], strides = [1, 1]} : vector<4x256xf32> to vector<2x256xf32>
    %5 = tpu.concatenate %1, %3, %4 in 0 : vector<4x256xf32>, vector<2x256xf32>, vector<2x256xf32> -> vector<8x256xf32>
    %c255_i32 = arith.constant 255 : i32
    %6 = tpu.dynamic_rotate %5 by %c255_i32 dim 1 : vector<8x256xf32>, i32 -> vector<8x256xf32>
    %c254_i32 = arith.constant 254 : i32
    %7 = tpu.dynamic_rotate %5 by %c254_i32 dim 1 : vector<8x256xf32>, i32 -> vector<8x256xf32>
    %c240_i32 = arith.constant 240 : i32
    %8 = tpu.dynamic_rotate %5 by %c240_i32 dim 1 : vector<8x256xf32>, i32 -> vector<8x256xf32>
    %c239_i32 = arith.constant 239 : i32
    %9 = tpu.dynamic_rotate %5 by %c239_i32 dim 1 : vector<8x256xf32>, i32 -> vector<8x256xf32>
    %c238_i32 = arith.constant 238 : i32
    %10 = tpu.dynamic_rotate %5 by %c238_i32 dim 1 : vector<8x256xf32>, i32 -> vector<8x256xf32>
    %c224_i32 = arith.constant 224 : i32
    %11 = tpu.dynamic_rotate %5 by %c224_i32 dim 1 : vector<8x256xf32>, i32 -> vector<8x256xf32>
    %c223_i32 = arith.constant 223 : i32
    %12 = tpu.dynamic_rotate %5 by %c223_i32 dim 1 : vector<8x256xf32>, i32 -> vector<8x256xf32>
    %c222_i32 = arith.constant 222 : i32
    %13 = tpu.dynamic_rotate %5 by %c222_i32 dim 1 : vector<8x256xf32>, i32 -> vector<8x256xf32>
    %14 = tpu.concatenate %5, %6, %7, %8, %9, %10, %11, %12, %13 in 0 : vector<8x256xf32>, vector<8x256xf32>, vector<8x256xf32>, vector<8x256xf32>, vector<8x256xf32>, vector<8x256xf32>, vector<8x256xf32>, vector<8x256xf32>, vector<8x256xf32> -> vector<72x256xf32>
    %c0_5 = arith.constant 0 : index
    %c0_6 = arith.constant 0 : index
    %15 = vector.load %arg4[%c0_5, %c0_6] : memref<32x72xf32, #tpu.memory_space<vmem>>, vector<32x72xf32>
    %cst = arith.constant dense<0.000000e+00> : vector<32x256xf32>
    %16 = tpu.matmul %15, %14, %cst {dimension_numbers = #tpu.dot_dimension_numbers<[1], [0], [0], [1], [0, 0, 1, 1], [], []>} : vector<32x72xf32>, vector<72x256xf32>, vector<32x256xf32> -> vector<32x256xf32>
    %c0_7 = arith.constant 0 : index
    %c0_8 = arith.constant 0 : index
    %17 = vector.load %arg5[%c0_7, %c0_8] : memref<32x1xf32, #tpu.memory_space<vmem>>, vector<32x1xf32>
    %18 = vector.broadcast %17 : vector<32x1xf32> to vector<32x256xf32>
    %19 = arith.addf %16, %18 : vector<32x256xf32>
    %cst_9 = arith.constant 0.000000e+00 : f32
    %20 = vector.broadcast %cst_9 : f32 to vector<32x256xf32>
    %21 = arith.maximumf %19, %20 : vector<32x256xf32>
    %c0_10 = arith.constant 0 : index
    %c0_11 = arith.constant 0 : index
    %22 = vector.load %arg6[%c0_10, %c0_11] : memref<32x32xf32, #tpu.memory_space<vmem>>, vector<32x32xf32>
    %cst_12 = arith.constant dense<0.000000e+00> : vector<32x256xf32>
    %23 = tpu.matmul %22, %21, %cst_12 {dimension_numbers = #tpu.dot_dimension_numbers<[1], [0], [0], [1], [0, 0, 1, 1], [], []>} : vector<32x32xf32>, vector<32x256xf32>, vector<32x256xf32> -> vector<32x256xf32>
    %c0_13 = arith.constant 0 : index
    %c0_14 = arith.constant 0 : index
    %24 = vector.load %arg7[%c0_13, %c0_14] : memref<32x1xf32, #tpu.memory_space<vmem>>, vector<32x1xf32>
    %25 = vector.broadcast %24 : vector<32x1xf32> to vector<32x256xf32>
    %26 = arith.addf %23, %25 : vector<32x256xf32>
    %cst_15 = arith.constant 0.000000e+00 : f32
    %27 = vector.broadcast %cst_15 : f32 to vector<32x256xf32>
    %28 = arith.maximumf %26, %27 : vector<32x256xf32>
    %c0_16 = arith.constant 0 : index
    %c0_17 = arith.constant 0 : index
    %29 = vector.load %arg8[%c0_16, %c0_17] : memref<8x32xf32, #tpu.memory_space<vmem>>, vector<8x32xf32>
    %cst_18 = arith.constant dense<0.000000e+00> : vector<8x256xf32>
    %30 = tpu.matmul %29, %28, %cst_18 {dimension_numbers = #tpu.dot_dimension_numbers<[1], [0], [0], [1], [0, 0, 1, 1], [], []>} : vector<8x32xf32>, vector<32x256xf32>, vector<8x256xf32> -> vector<8x256xf32>
    %c0_19 = arith.constant 0 : index
    %c0_20 = arith.constant 0 : index
    %31 = vector.load %arg9[%c0_19, %c0_20] : memref<8x1xf32, #tpu.memory_space<vmem>>, vector<8x1xf32>
    %32 = vector.broadcast %31 : vector<8x1xf32> to vector<8x256xf32>
    %33 = arith.addf %30, %32 : vector<8x256xf32>
    %34 = arith.negf %33 : vector<8x256xf32>
    %35 = math.exp %34 : vector<8x256xf32>
    %cst_21 = arith.constant 1.000000e+00 : f32
    %36 = vector.broadcast %cst_21 : f32 to vector<8x256xf32>
    %37 = arith.addf %36, %35 : vector<8x256xf32>
    %38 = arith.divf %36, %37 : vector<8x256xf32>
    %c0_22 = arith.constant 0 : index
    %c0_23 = arith.constant 0 : index
    %39 = vector.load %arg3[%c0_22, %c0_23] : memref<1x256xf32, #tpu.memory_space<vmem>>, vector<1x256xf32>
    %40 = vector.extract_strided_slice %38 {offsets = [0, 0], sizes = [4, 256], strides = [1, 1]} : vector<8x256xf32> to vector<4x256xf32>
    %c0_24 = arith.constant 0 : index
    %c0_25 = arith.constant 0 : index
    %c0_26 = arith.constant 0 : index
    %41 = vector.load %arg10[%c0_24, %c0_25, %c0_26] : memref<1x4x256xf32, #tpu.memory_space<vmem>>, vector<1x4x256xf32>
    %42 = vector.shape_cast %41 : vector<1x4x256xf32> to vector<4x256xf32>
    %43 = vector.shape_cast %40 : vector<4x256xf32> to vector<1x4x256xf32>
    tpu.vector_store %arg10[%c0_24, %c0_25, %c0_26], %43 {strides = array<i32>} : memref<1x4x256xf32, #tpu.memory_space<vmem>>, vector<1x4x256xf32>,
    %44 = vector.extract_strided_slice %38 {offsets = [4, 0], sizes = [2, 256], strides = [1, 1]} : vector<8x256xf32> to vector<2x256xf32>
    %c17_i32 = arith.constant 17 : i32
    %45 = tpu.dynamic_rotate %44 by %c17_i32 dim 1 : vector<2x256xf32>, i32 -> vector<2x256xf32>
    %46 = vector.broadcast %39 : vector<1x256xf32> to vector<2x256xf32>
    %47 = arith.mulf %45, %46 : vector<2x256xf32>
    %c0_27 = arith.constant 0 : index
    %c0_28 = arith.constant 0 : index
    %c0_29 = arith.constant 0 : index
    %48 = vector.load %arg11[%c0_27, %c0_28, %c0_29] : memref<1x2x256xf32, #tpu.memory_space<vmem>>, vector<1x2x256xf32>
    %49 = vector.shape_cast %48 : vector<1x2x256xf32> to vector<2x256xf32>
    %50 = vector.shape_cast %47 : vector<2x256xf32> to vector<1x2x256xf32>
    tpu.vector_store %arg11[%c0_27, %c0_28, %c0_29], %50 {strides = array<i32>} : memref<1x2x256xf32, #tpu.memory_space<vmem>>, vector<1x2x256xf32>,
    return
  }
  func.func @transform_0(%arg0: i32) -> (i32, i32, i32) {
    %c0_i32 = arith.constant 0 : i32
    %c0_i32_0 = arith.constant 0 : i32
    %c0_i32_1 = arith.constant 0 : i32
    return %arg0, %c0_i32, %c0_i32_0 : i32, i32, i32
  }
  func.func @transform_1(%arg0: i32) -> (i32, i32, i32) {
    %c0_i32 = arith.constant 0 : i32
    %c0_i32_0 = arith.constant 0 : i32
    %c0_i32_1 = arith.constant 0 : i32
    return %arg0, %c0_i32, %c0_i32_0 : i32, i32, i32
  }
  func.func @transform_2(%arg0: i32) -> (i32, i32) {
    %c0_i32 = arith.constant 0 : i32
    %c0_i32_0 = arith.constant 0 : i32
    %c0_i32_1 = arith.constant 0 : i32
    return %c0_i32, %c0_i32_0 : i32, i32
  }
  func.func @transform_3(%arg0: i32) -> (i32, i32) {
    %c0_i32 = arith.constant 0 : i32
    %c0_i32_0 = arith.constant 0 : i32
    %c0_i32_1 = arith.constant 0 : i32
    return %c0_i32, %c0_i32_0 : i32, i32
  }
  func.func @transform_4(%arg0: i32) -> (i32, i32) {
    %c0_i32 = arith.constant 0 : i32
    %c0_i32_0 = arith.constant 0 : i32
    %c0_i32_1 = arith.constant 0 : i32
    return %c0_i32, %c0_i32_0 : i32, i32
  }
  func.func @transform_5(%arg0: i32) -> (i32, i32) {
    %c0_i32 = arith.constant 0 : i32
    %c0_i32_0 = arith.constant 0 : i32
    %c0_i32_1 = arith.constant 0 : i32
    return %c0_i32, %c0_i32_0 : i32, i32
  }
  func.func @transform_6(%arg0: i32) -> (i32, i32) {
    %c0_i32 = arith.constant 0 : i32
    %c0_i32_0 = arith.constant 0 : i32
    %c0_i32_1 = arith.constant 0 : i32
    return %c0_i32, %c0_i32_0 : i32, i32
  }
  func.func @transform_7(%arg0: i32) -> (i32, i32) {
    %c0_i32 = arith.constant 0 : i32
    %c0_i32_0 = arith.constant 0 : i32
    %c0_i32_1 = arith.constant 0 : i32
    return %c0_i32, %c0_i32_0 : i32, i32
  }
  func.func @transform_8(%arg0: i32) -> (i32, i32) {
    %c0_i32 = arith.constant 0 : i32
    %c0_i32_0 = arith.constant 0 : i32
    %c0_i32_1 = arith.constant 0 : i32
    return %c0_i32, %c0_i32_0 : i32, i32
  }
  func.func @transform_9(%arg0: i32) -> (i32, i32, i32) {
    %c0_i32 = arith.constant 0 : i32
    %c0_i32_0 = arith.constant 0 : i32
    %c0_i32_1 = arith.constant 0 : i32
    return %arg0, %c0_i32, %c0_i32_0 : i32, i32, i32
  }
  func.func @transform_10(%arg0: i32) -> (i32, i32, i32) {
    %c0_i32 = arith.constant 0 : i32
    %c0_i32_0 = arith.constant 0 : i32
    %c0_i32_1 = arith.constant 0 : i32
    return %arg0, %c0_i32, %c0_i32_0 : i32, i32, i32
  }
}

</mosaic_0001>

<llo_original>
// kernel: _nca_step.1
$region0: #{_nca_step.1}
  #allocation0 [shape = 'u32[]', space=smem, size = 0x4, offset = 0x4, fixed_abs, tag = 'smem constant byte address 0x4 - core index']
  #allocation1 [shape = 'u32[144,128]{1,0:T(1,128)}', space=vmem, size = 0x12000, scoped, tag = 'internal scratch']
  %s0 = inlined_call_operand.hbm [shape: f32[2,4,256], index: 0, kind: input, shape index: {}]
  %s1 = inlined_call_operand.vmem [shape: f32[2,2,256], index: 1, kind: input, shape index: {}]
  %s2 = inlined_call_operand.vmem [shape: f32[1,256], index: 2, kind: input, shape index: {}]
  %s3 = inlined_call_operand.vmem [shape: f32[32,72], index: 3, kind: input, shape index: {}]
  %s4 = inlined_call_operand.vmem [shape: f32[32,1], index: 4, kind: input, shape index: {}]
  %s5 = inlined_call_operand.vmem [shape: f32[32,32], index: 5, kind: input, shape index: {}]
  %s6 = inlined_call_operand.vmem [shape: f32[32,1], index: 6, kind: input, shape index: {}]
  %s7 = inlined_call_operand.vmem [shape: f32[8,32], index: 7, kind: input, shape index: {}]
  %s8 = inlined_call_operand.vmem [shape: f32[8,1], index: 8, kind: input, shape index: {}]
  %s9 = inlined_call_operand.hbm [shape: f32[2,4,256], index: 9, kind: output, shape index: {0}]
  %s10 = inlined_call_operand.hbm [shape: f32[2,2,256], index: 10, kind: output, shape index: {1}]
  %11 = xla_tuple %s9, %s10
  %s12 = sld [smem:[#allocation0]]
  $region81: #{_nca_step.1} parent=0
    _
  %s14 = ssub.s32 1, %s12
  %s15 = scalar_select 0, %s14, %s12
  $region1: #{_nca_step.1} parent=0
    #allocation2 [shape = 'u8[8192]{0}', space=vmem, size = 0x2000, scoped, tag = 'input window, operand 0']
    #allocation3 [shape = 's32[2]{0}', space=sflag, size = 0x8, scoped, tag = 'scoped memory for _nca_step.1']
    #allocation4 [shape = 's32[2]{0}', space=sflag, size = 0x8, scoped, tag = 'scoped memory for _nca_step.1']
    #allocation5 [shape = 'u8[8192]{0}', space=vmem, size = 0x2000, scoped, tag = 'output window, operand 0']
    #allocation6 [shape = 'u8[4096]{0}', space=vmem, size = 0x1000, scoped, tag = 'output window, operand 1']
    #allocation7 [shape = 's32[2]{0}', space=sflag, size = 0x8, scoped, tag = 'scoped memory for _nca_step.1']
    %16 = vsyncpa [#allocation3], 0
    %s17 = scalar_lea.sflag [#allocation3], 1
    %18 = vsyncpa %s17, 0
    %19 = vsyncpa [#allocation4], 0
    %s20 = scalar_lea.sflag [#allocation4], 1
    %21 = vsyncpa %s20, 0
    %22 = vsyncpa [#allocation7], 0
    %s23 = scalar_lea.sflag [#allocation7], 1
    %24 = vsyncpa %s23, 0
    loop: start=0, step=1, limit=4
    $region2: #{_nca_step.1} parent=1 // loop_pre_header
      _
    $region3: #{_nca_step.1} parent=1 // loop_header
      %s26 = sphi 0, %s30
      %p27 = scmp.ge.s32.totalorder %s26, 4
      %s36 = sphi 0, %s38
      %s39 = sphi 0, %s36
      %s40 = sphi 0, %s39
      %s56 = sphi 0, %s40
      %s62 = sphi 0, %s64
      %s65 = sphi 0, %s62
      %s66 = sphi 0, %s65
      %s82 = sphi 0, %s66
      %s86 = sphi 0, %s86
      %s88 = sphi 0, %s86
      %s89 = sphi 0, %s88
      %s103 = sphi 0, %s89
      %s107 = sphi 0, %s107
      %s109 = sphi 0, %s107
      %s110 = sphi 0, %s109
      %s124 = sphi 0, %s110
      %s128 = sphi 0, %s128
      %s130 = sphi 0, %s128
      %s131 = sphi 0, %s130
      %s145 = sphi 0, %s131
      %s149 = sphi 0, %s149
      %s151 = sphi 0, %s149
      %s152 = sphi 0, %s151
      %s166 = sphi 0, %s152
      %s170 = sphi 0, %s170
      %s172 = sphi 0, %s170
      %s173 = sphi 0, %s172
      %s187 = sphi 0, %s173
      %s191 = sphi 0, %s191
      %s193 = sphi 0, %s191
      %s194 = sphi 0, %s193
      %s208 = sphi 0, %s194
      %s212 = sphi 0, %s212
      %s214 = sphi 0, %s212
      %s215 = sphi 0, %s214
      %s229 = sphi 0, %s215
      %s235 = sphi 0, %s237
      %s238 = sphi 0, %s235
      %s239 = sphi 0, %s238
      %s255 = sphi 0, %s239
      %s261 = sphi 0, %s263
      %s264 = sphi 0, %s261
      %s265 = sphi 0, %s264
      %s281 = sphi 0, %s265
    $region4: #{_nca_step.1} parent=1 // loop_header_branch
      %29 = sbr.rel (%p27) target = $region8
    $region5: #{_nca_step.1} parent=1 // loop_body
      %s31 = ssub.s32 %s26, 1
      %s32 = ssub.s32 %s26, 2
      %s33 = sadd.s32 %s26, 1
      %s34 = ssub.s32 %s26, %s33
      %p35 = scmp.eq.s32.totalorder %s34, 0
      %s37 = sadd.s32 %s36, 1
      %s38 = scalar_select %p35, %s36, %s37
      %p41 = pneg %p35
      %p42 = scmp.eq.s32.totalorder %s26, 1
      %p43 = por %p41, %p42
      %p44 = scmp.ne.s32.totalorder %s36, %s39
      %p45 = scmp.eq.s32.totalorder %s26, 0
      %p46 = por %p44, %p45
      %p47 = scmp.ne.s32.totalorder %s36, %s39
      %p48 = scmp.eq.s32.totalorder %s31, 1
      %p49 = por %p47, %p48
      %p50 = scmp.ne.s32.totalorder %s39, %s40
      %p51 = scmp.eq.s32.totalorder %s31, 0
      %p52 = por %p50, %p51
      %p53 = scmp.ne.s32.totalorder %s39, %s40
      %p54 = scmp.eq.s32.totalorder %s32, 1
      %p55 = por %p53, %p54
      %p57 = scmp.ne.s32.totalorder %s40, %s56
      %p58 = scmp.eq.s32.totalorder %s32, 0
      %p59 = por %p57, %p58
      %s60 = ssub.s32 %s26, %s33
      %p61 = scmp.eq.s32.totalorder %s60, 0
      %s63 = sadd.s32 %s62, 1
      %s64 = scalar_select %p61, %s62, %s63
      %p67 = pneg %p61
      %p68 = scmp.eq.s32.totalorder %s26, 1
      %p69 = por %p67, %p68
      %p70 = scmp.ne.s32.totalorder %s62, %s65
      %p71 = scmp.eq.s32.totalorder %s26, 0
      %p72 = por %p70, %p71
      %p73 = scmp.ne.s32.totalorder %s62, %s65
      %p74 = scmp.eq.s32.totalorder %s31, 1
      %p75 = por %p73, %p74
      %p76 = scmp.ne.s32.totalorder %s65, %s66
      %p77 = scmp.eq.s32.totalorder %s31, 0
      %p78 = por %p76, %p77
      %p79 = scmp.ne.s32.totalorder %s65, %s66
      %p80 = scmp.eq.s32.totalorder %s32, 1
      %p81 = por %p79, %p80
      %p83 = scmp.ne.s32.totalorder %s66, %s82
      %p84 = scmp.eq.s32.totalorder %s32, 0
      %p85 = por %p83, %p84
      %s87 = sadd.s32 %s86, 1
      %p90 = scmp.eq.s32.totalorder %s26, 1
      %p91 = scmp.ne.s32.totalorder %s86, %s88
      %p92 = scmp.eq.s32.totalorder %s26, 0
      %p93 = por %p91, %p92
      %p94 = scmp.ne.s32.totalorder %s86, %s88
      %p95 = scmp.eq.s32.totalorder %s31, 1
      %p96 = por %p94, %p95
      %p97 = scmp.ne.s32.totalorder %s88, %s89
      %p98 = scmp.eq.s32.totalorder %s31, 0
      %p99 = por %p97, %p98
      %p100 = scmp.ne.s32.totalorder %s88, %s89
      %p101 = scmp.eq.s32.totalorder %s32, 1
      %p102 = por %p100, %p101
      %p104 = scmp.ne.s32.totalorder %s89, %s103
      %p105 = scmp.eq.s32.totalorder %s32, 0
      %p106 = por %p104, %p105
      %s108 = sadd.s32 %s107, 1
      %p111 = scmp.eq.s32.totalorder %s26, 1
      %p112 = scmp.ne.s32.totalorder %s107, %s109
      %p113 = scmp.eq.s32.totalorder %s26, 0
      %p114 = por %p112, %p113
      %p115 = scmp.ne.s32.totalorder %s107, %s109
      %p116 = scmp.eq.s32.totalorder %s31, 1
      %p117 = por %p115, %p116
      %p118 = scmp.ne.s32.totalorder %s109, %s110
      %p119 = scmp.eq.s32.totalorder %s31, 0
      %p120 = por %p118, %p119
      %p121 = scmp.ne.s32.totalorder %s109, %s110
      %p122 = scmp.eq.s32.totalorder %s32, 1
      %p123 = por %p121, %p122
      %p125 = scmp.ne.s32.totalorder %s110, %s124
      %p126 = scmp.eq.s32.totalorder %s32, 0
      %p127 = por %p125, %p126
      %s129 = sadd.s32 %s128, 1
      %p132 = scmp.eq.s32.totalorder %s26, 1
      %p133 = scmp.ne.s32.totalorder %s128, %s130
      %p134 = scmp.eq.s32.totalorder %s26, 0
      %p135 = por %p133, %p134
      %p136 = scmp.ne.s32.totalorder %s128, %s130
      %p137 = scmp.eq.s32.totalorder %s31, 1
      %p138 = por %p136, %p137
      %p139 = scmp.ne.s32.totalorder %s130, %s131
      %p140 = scmp.eq.s32.totalorder %s31, 0
      %p141 = por %p139, %p140
      %p142 = scmp.ne.s32.totalorder %s130, %s131
      %p143 = scmp.eq.s32.totalorder %s32, 1
      %p144 = por %p142, %p143
      %p146 = scmp.ne.s32.totalorder %s131, %s145
      %p147 = scmp.eq.s32.totalorder %s32, 0
      %p148 = por %p146, %p147
      %s150 = sadd.s32 %s149, 1
      %p153 = scmp.eq.s32.totalorder %s26, 1
      %p154 = scmp.ne.s32.totalorder %s149, %s151
      %p155 = scmp.eq.s32.totalorder %s26, 0
      %p156 = por %p154, %p155
      %p157 = scmp.ne.s32.totalorder %s149, %s151
      %p158 = scmp.eq.s32.totalorder %s31, 1
      %p159 = por %p157, %p158
      %p160 = scmp.ne.s32.totalorder %s151, %s152
      %p161 = scmp.eq.s32.totalorder %s31, 0
      %p162 = por %p160, %p161
      %p163 = scmp.ne.s32.totalorder %s151, %s152
      %p164 = scmp.eq.s32.totalorder %s32, 1
      %p165 = por %p163, %p164
      %p167 = scmp.ne.s32.totalorder %s152, %s166
      %p168 = scmp.eq.s32.totalorder %s32, 0
      %p169 = por %p167, %p168
      %s171 = sadd.s32 %s170, 1
      %p174 = scmp.eq.s32.totalorder %s26, 1
      %p175 = scmp.ne.s32.totalorder %s170, %s172
      %p176 = scmp.eq.s32.totalorder %s26, 0
      %p177 = por %p175, %p176
      %p178 = scmp.ne.s32.totalorder %s170, %s172
      %p179 = scmp.eq.s32.totalorder %s31, 1
      %p180 = por %p178, %p179
      %p181 = scmp.ne.s32.totalorder %s172, %s173
      %p182 = scmp.eq.s32.totalorder %s31, 0
      %p183 = por %p181, %p182
      %p184 = scmp.ne.s32.totalorder %s172, %s173
      %p185 = scmp.eq.s32.totalorder %s32, 1
      %p186 = por %p184, %p185
      %p188 = scmp.ne.s32.totalorder %s173, %s187
      %p189 = scmp.eq.s32.totalorder %s32, 0
      %p190 = por %p188, %p189
      %s192 = sadd.s32 %s191, 1
      %p195 = scmp.eq.s32.totalorder %s26, 1
      %p196 = scmp.ne.s32.totalorder %s191, %s193
      %p197 = scmp.eq.s32.totalorder %s26, 0
      %p198 = por %p196, %p197
      %p199 = scmp.ne.s32.totalorder %s191, %s193
      %p200 = scmp.eq.s32.totalorder %s31, 1
      %p201 = por %p199, %p200
      %p202 = scmp.ne.s32.totalorder %s193, %s194
      %p203 = scmp.eq.s32.totalorder %s31, 0
      %p204 = por %p202, %p203
      %p205 = scmp.ne.s32.totalorder %s193, %s194
      %p206 = scmp.eq.s32.totalorder %s32, 1
      %p207 = por %p205, %p206
      %p209 = scmp.ne.s32.totalorder %s194, %s208
      %p210 = scmp.eq.s32.totalorder %s32, 0
      %p211 = por %p209, %p210
      %s213 = sadd.s32 %s212, 1
      %p216 = scmp.eq.s32.totalorder %s26, 1
      %p217 = scmp.ne.s32.totalorder %s212, %s214
      %p218 = scmp.eq.s32.totalorder %s26, 0
      %p219 = por %p217, %p218
      %p220 = scmp.ne.s32.totalorder %s212, %s214
      %p221 = scmp.eq.s32.totalorder %s31, 1
      %p222 = por %p220, %p221
      %p223 = scmp.ne.s32.totalorder %s214, %s215
      %p224 = scmp.eq.s32.totalorder %s31, 0
      %p225 = por %p223, %p224
      %p226 = scmp.ne.s32.totalorder %s214, %s215
      %p227 = scmp.eq.s32.totalorder %s32, 1
      %p228 = por %p226, %p227
      %p230 = scmp.ne.s32.totalorder %s215, %s229
      %p231 = scmp.eq.s32.totalorder %s32, 0
      %p232 = por %p230, %p231
      %s233 = ssub.s32 %s26, %s33
      %p234 = scmp.eq.s32.totalorder %s233, 0
      %s236 = sadd.s32 %s235, 1
      %s237 = scalar_select %p234, %s235, %s236
      %p240 = pneg %p234
      %p241 = scmp.eq.s32.totalorder %s26, 1
      %p242 = por %p240, %p241
      %p243 = scmp.ne.s32.totalorder %s235, %s238
      %p244 = scmp.eq.s32.totalorder %s26, 0
      %p245 = por %p243, %p244
      %p246 = scmp.ne.s32.totalorder %s235, %s238
      %p247 = scmp.eq.s32.totalorder %s31, 1
      %p248 = por %p246, %p247
      %p249 = scmp.ne.s32.totalorder %s238, %s239
      %p250 = scmp.eq.s32.totalorder %s31, 0
      %p251 = por %p249, %p250
      %p252 = scmp.ne.s32.totalorder %s238, %s239
      %p253 = scmp.eq.s32.totalorder %s32, 1
      %p254 = por %p252, %p253
      %p256 = scmp.ne.s32.totalorder %s239, %s255
      %p257 = scmp.eq.s32.totalorder %s32, 0
      %p258 = por %p256, %p257
      %s259 = ssub.s32 %s26, %s33
      %p260 = scmp.eq.s32.totalorder %s259, 0
      %s262 = sadd.s32 %s261, 1
      %s263 = scalar_select %p260, %s261, %s262
      %p266 = pneg %p260
      %p267 = scmp.eq.s32.totalorder %s26, 1
      %p268 = por %p266, %p267
      %p269 = scmp.ne.s32.totalorder %s261, %s264
      %p270 = scmp.eq.s32.totalorder %s26, 0
      %p271 = por %p269, %p270
      %p272 = scmp.ne.s32.totalorder %s261, %s264
      %p273 = scmp.eq.s32.totalorder %s31, 1
      %p274 = por %p272, %p273
      %p275 = scmp.ne.s32.totalorder %s264, %s265
      %p276 = scmp.eq.s32.totalorder %s31, 0
      %p277 = por %p275, %p276
      %p278 = scmp.ne.s32.totalorder %s264, %s265
      %p279 = scmp.eq.s32.totalorder %s32, 1
      %p280 = por %p278, %p279
      %p282 = scmp.ne.s32.totalorder %s265, %s281
      %p283 = scmp.eq.s32.totalorder %s32, 0
      %p284 = por %p282, %p283
      %p285 = scmp.le.s32.totalorder 1, %s26
      %p286 = scmp.lt.s32.totalorder %s26, 3
      %p287 = pnand %p285, %p286
      %p288 = pneg %p287
      // Predicated region
      $region9: #{_nca_step.1} parent=5 // pred_check
        _
      $region10: #{_nca_step.1} parent=5 // pred_check_branch
        %290 = sbr.rel (%p287) target = $region12
      $region11: #{_nca_step.1} parent=5 // pred_region
        %s291 = ssub.s32 %s26, 1
        // Predicated region
        $region13: #{_nca_step.1} parent=11 // pred_check
          %p292 = pneg %p99
        $region14: #{_nca_step.1} parent=11 // pred_check_branch
          %294 = sbr.rel (%p292) target = $region16
        $region15: #{_nca_step.1} parent=11 // pred_region
          _
        $region16: #{_nca_step.1} parent=11 // pred_fallthru
          _
        // Predicated region
        $region17: #{_nca_step.1} parent=11 // pred_check
          %p295 = pneg %p120
        $region18: #{_nca_step.1} parent=11 // pred_check_branch
          %297 = sbr.rel (%p295) target = $region20
        $region19: #{_nca_step.1} parent=11 // pred_region
          _
        $region20: #{_nca_step.1} parent=11 // pred_fallthru
          _
        // Predicated region
        $region21: #{_nca_step.1} parent=11 // pred_check
          %p298 = pneg %p141
        $region22: #{_nca_step.1} parent=11 // pred_check_branch
          %300 = sbr.rel (%p298) target = $region24
        $region23: #{_nca_step.1} parent=11 // pred_region
          _
        $region24: #{_nca_step.1} parent=11 // pred_fallthru
          _
        // Predicated region
        $region25: #{_nca_step.1} parent=11 // pred_check
          %p301 = pneg %p162
        $region26: #{_nca_step.1} parent=11 // pred_check_branch
          %303 = sbr.rel (%p301) target = $region28
        $region27: #{_nca_step.1} parent=11 // pred_region
          _
        $region28: #{_nca_step.1} parent=11 // pred_fallthru
          _
        // Predicated region
        $region29: #{_nca_step.1} parent=11 // pred_check
          %p304 = pneg %p183
        $region30: #{_nca_step.1} parent=11 // pred_check_branch
          %306 = sbr.rel (%p304) target = $region32
        $region31: #{_nca_step.1} parent=11 // pred_region
          _
        $region32: #{_nca_step.1} parent=11 // pred_fallthru
          _
        // Predicated region
        $region33: #{_nca_step.1} parent=11 // pred_check
          %p307 = pneg %p204
        $region34: #{_nca_step.1} parent=11 // pred_check_branch
          %309 = sbr.rel (%p307) target = $region36
        $region35: #{_nca_step.1} parent=11 // pred_region
          _
        $region36: #{_nca_step.1} parent=11 // pred_fallthru
          _
        // Predicated region
        $region37: #{_nca_step.1} parent=11 // pred_check
          %p310 = pneg %p225
        $region38: #{_nca_step.1} parent=11 // pred_check_branch
          %312 = sbr.rel (%p310) target = $region40
        $region39: #{_nca_step.1} parent=11 // pred_region
          _
        $region40: #{_nca_step.1} parent=11 // pred_fallthru
          _
      $region12: #{_nca_step.1} parent=5 // pred_fallthru
        _
      %p313 = scmp.lt.s32.totalorder %s26, 2
      // Predicated region
      $region41: #{_nca_step.1} parent=5 // pred_check
        %p314 = pneg %p313
      $region42: #{_nca_step.1} parent=5 // pred_check_branch
        %316 = sbr.rel (%p314) target = $region44
      $region43: #{_nca_step.1} parent=5 // pred_region
        // Predicated region
        $region45: #{_nca_step.1} parent=43 // pred_check
          %p317 = pneg %p46
        $region46: #{_nca_step.1} parent=43 // pred_check_branch
          %319 = sbr.rel (%p317) target = $region48
        $region47: #{_nca_step.1} parent=43 // pred_region
          %s320 = sand.u32 %s36, 1
          %s321 = scalar_lea.sflag [#allocation3], %s320
          %s322 = sand.u32 %s36, 1
          %s323 = smul.addr %s322, 8
          %s324 = scalar_lea.vmem [#allocation2], %s323
          %s326 = ssub.s32 128, 128
          %327 = vsyncadd %s321, %s326
          %s328 = smul.addr %s26, 2
          %s329 = smul.addr %s328, 64
          %s330 = scalar_lea.hbm %s0, %s329
          %s332 = sshll.u32 %s324, 4
          %s333 = int_to_ptr.vmem [resolvable:$true] %s332
          %335 = dma.hbm_to_vmem [thread:$0]  %s330, 128, %s333, %s321
        $region48: #{_nca_step.1} parent=43 // pred_fallthru
          _
        // Predicated region
        $region49: #{_nca_step.1} parent=43 // pred_check
          %p336 = pneg %p72
        $region50: #{_nca_step.1} parent=43 // pred_check_branch
          %338 = sbr.rel (%p336) target = $region52
        $region51: #{_nca_step.1} parent=43 // pred_region
          %p339 = scmp.lt.s32.totalorder %s26, 1
          %s340 = scalar_select %p339, %s26, 1
          %s341 = smul.addr %s340, 2
          %s342 = smul.addr %s341, 2
          %s343 = scalar_lea.vmem %s1, %s342
        $region52: #{_nca_step.1} parent=43 // pred_fallthru
          _
      $region44: #{_nca_step.1} parent=5 // pred_fallthru
        _
      %p344 = scmp.le.s32.totalorder 1, %s26
      %p345 = scmp.lt.s32.totalorder %s26, 3
      %p346 = pnand %p344, %p345
      %p347 = pneg %p346
      // Predicated region
      $region53: #{_nca_step.1} parent=5 // pred_check
        _
      $region54: #{_nca_step.1} parent=5 // pred_check_branch
        %349 = sbr.rel (%p346) target = $region56
      $region55: #{_nca_step.1} parent=5 // pred_region
        %s350 = ssub.s32 %s26, 1
        %s351 = sand.u32 %s39, 1
        %s352 = scalar_lea.sflag [#allocation3], %s351
        %s353 = sand.u32 %s39, 1
        %s354 = smul.addr %s353, 8
        %s355 = scalar_lea.vmem [#allocation2], %s354
        // Predicated region
        $region57: #{_nca_step.1} parent=55 // pred_check
          %p356 = pneg %p52
        $region58: #{_nca_step.1} parent=55 // pred_check_branch
          %358 = sbr.rel (%p356) target = $region60
        $region59: #{_nca_step.1} parent=55 // pred_region
          %359 = dma.done %s352, 128
        $region60: #{_nca_step.1} parent=55 // pred_fallthru
          _
        %s360 = sand.u32 %s39, 1
        %s361 = scalar_lea.sflag [#allocation3], %s360
        %s362 = sand.u32 %s39, 1
        %s363 = smul.addr %s362, 8
        %s364 = scalar_lea.vmem [#allocation2], %s363
        %p365 = pneg %p52
        %p366 = pneg %p49
        %p367 = scmp.lt.s32.totalorder %s31, 1
        %s368 = scalar_select %p367, %s31, 1
        %s369 = smul.addr %s368, 2
        %s370 = smul.addr %s369, 2
        %s371 = scalar_lea.vmem %s1, %s370
        %p372 = pneg %p78
        %p373 = pneg %p75
        %p374 = pneg %p99
        %p375 = pneg %p96
        %p376 = pneg %p120
        %p377 = pneg %p117
        %p378 = pneg %p141
        %p379 = pneg %p138
        %p380 = pneg %p162
        %p381 = pneg %p159
        %p382 = pneg %p183
        %p383 = pneg %p180
        %p384 = pneg %p204
        %p385 = pneg %p201
        %p386 = pneg %p225
        %p387 = pneg %p222
        %p388 = pneg %p251
        %p389 = pneg %p248
        %s390 = sand.u32 %s238, 1
        %s391 = scalar_lea.sflag [#allocation4], %s390
        %s392 = sand.u32 %s238, 1
        %s393 = smul.addr %s392, 8
        %s394 = scalar_lea.vmem [#allocation5], %s393
        %p395 = pneg %p277
        %p396 = pneg %p274
        %s397 = sand.u32 %s264, 1
        %s398 = scalar_lea.sflag [#allocation7], %s397
        %s399 = sand.u32 %s264, 1
        %s400 = smul.addr %s399, 4
        %s401 = scalar_lea.vmem [#allocation6], %s400
        %p402 = scmp.lt.s32.totalorder %s31, 1
        %s403 = scalar_select %p402, %s31, 1
        %s404 = smul.addr %s403, 2
        %s405 = smul.addr %s404, 2
        %s406 = scalar_lea.vmem %s1, %s405
        %v407 = vld [vmem:[%s355] sm:$0xff]
        %v408 = vld [vmem:[%s406] sm:$0xf]
        %v410 = vcombine.high %v407, %v407
        %v414 = vunpack.c.l.s4 1983009808
        %v415 = vunpack.c.0.s8 %v414
        %v416 = vlaneseq
        %v417 = vshrl.u32 %v416, 7
        %v418 = vsub.s32 %v415, %v417
        %v419 = vrot.slane %v408, %v418
        %v420 = vcombine.low %v419, %v419
        %v423 = vrot.slane %v407, 2
        %v424 = vrot.slane %v410, 2
        %vm427 = vcmask 1043456
        %v428 = vsel %vm427, %v407, %v420
        %v429 = vsel %vm427, %v410, %v419
        %vm430 = vcmask 1045504
        %v431 = vsel %vm430, %v428, %v423
        %v432 = vsel %vm430, %v429, %v424
        %433 = vrot.lane.b32.xlu0 %v431, 127
        %v434 = vpop.permute.xlu0 %433
        %435 = vrot.lane.b32.xlu0 %v432, 127
        %v436 = vpop.permute.xlu0 %435
        %v437 = vlaneseq
        %v438 = vand.u32 %v437, 127
        %vm439 = vcmp.lt.s32.totalorder %v438, 127
        %v440 = vsel %vm439, %v434, %v436
        %v441 = vsel %vm439, %v436, %v434
        %442 = vrot.lane.b32.xlu0 %v431, 126
        %v443 = vpop.permute.xlu0 %442
        %444 = vrot.lane.b32.xlu0 %v432, 126
        %v445 = vpop.permute.xlu0 %444
        %vm446 = vcmp.lt.s32.totalorder %v438, 126
        %v447 = vsel %vm446, %v443, %v445
        %v448 = vsel %vm446, %v445, %v443
        %449 = vrot.lane.b32.xlu0 %v431, 112
        %v450 = vpop.permute.xlu0 %449
        %451 = vrot.lane.b32.xlu0 %v432, 112
        %v452 = vpop.permute.xlu0 %451
        %vm453 = vcmp.lt.s32.totalorder %v438, 112
        %v454 = vsel %vm453, %v450, %v452
        %v455 = vsel %vm453, %v452, %v450
        %456 = vrot.lane.b32.xlu0 %v431, 111
        %v457 = vpop.permute.xlu0 %456
        %458 = vrot.lane.b32.xlu0 %v432, 111
        %v459 = vpop.permute.xlu0 %458
        %vm460 = vcmp.lt.s32.totalorder %v438, 111
        %v461 = vsel %vm460, %v457, %v459
        %v462 = vsel %vm460, %v459, %v457
        %463 = vrot.lane.b32.xlu0 %v431, 110
        %v464 = vpop.permute.xlu0 %463
        %465 = vrot.lane.b32.xlu0 %v432, 110
        %v466 = vpop.permute.xlu0 %465
        %vm467 = vcmp.lt.s32.totalorder %v438, 110
        %v468 = vsel %vm467, %v464, %v466
        %v469 = vsel %vm467, %v466, %v464
        %470 = vrot.lane.b32.xlu0 %v431, 96
        %v471 = vpop.permute.xlu0 %470
        %472 = vrot.lane.b32.xlu0 %v432, 96
        %v473 = vpop.permute.xlu0 %472
        %vm474 = vcmp.lt.s32.totalorder %v438, 96
        %v475 = vsel %vm474, %v471, %v473
        %v476 = vsel %vm474, %v473, %v471
        %477 = vrot.lane.b32.xlu0 %v431, 95
        %v478 = vpop.permute.xlu0 %477
        %479 = vrot.lane.b32.xlu0 %v432, 95
        %v480 = vpop.permute.xlu0 %479
        %vm481 = vcmp.lt.s32.totalorder %v438, 95
        %v482 = vsel %vm481, %v478, %v480
        %v483 = vsel %vm481, %v480, %v478
        %484 = vrot.lane.b32.xlu0 %v431, 94
        %v485 = vpop.permute.xlu0 %484
        %486 = vrot.lane.b32.xlu0 %v432, 94
        %v487 = vpop.permute.xlu0 %486
        %vm488 = vcmp.lt.s32.totalorder %v438, 94
        %v489 = vsel %vm488, %v485, %v487
        %v490 = vsel %vm488, %v487, %v485
        %v491 = vld [vmem:[%s3] sm:$0xff]
        %v492 = vld [vmem:[%s3 + $0x8] sm:$0xff]
        %v493 = vld [vmem:[%s3 + $0x10] sm:$0xff]
        %v494 = vld [vmem:[%s3 + $0x18] sm:$0xff]
        %v495 = vld [vmem:[%s4] sm:$0xff]
        %v496 = vld [vmem:[%s4 + $0x8] sm:$0xff]
        %v497 = vld [vmem:[%s4 + $0x10] sm:$0xff]
        %v498 = vld [vmem:[%s4 + $0x18] sm:$0xff]
        %500 = vset.pattern.permute.xlu0 0
        %501 = vperm.xlu0 %500, %v495
        %v502 = vpop.permute.xlu0 %501
        %505 = vset.pattern.permute.xlu0 0
        %506 = vperm.xlu0 %505, %v496
        %v507 = vpop.permute.xlu0 %506
        %510 = vset.pattern.permute.xlu0 0
        %511 = vperm.xlu0 %510, %v497
        %v512 = vpop.permute.xlu0 %511
        %515 = vset.pattern.permute.xlu0 0
        %516 = vperm.xlu0 %515, %v498
        %v517 = vpop.permute.xlu0 %516
        %vm519 = vcmask 588800
        %v521 = vsel %vm519, %v491, 0
        %v524 = vsel %vm519, %v492, 0
        %v527 = vsel %vm519, %v493, 0
        %v530 = vsel %vm519, %v494, 0
        %532 = vmatprep.subr.mxu0 %v432
        %533 = vmatpush1.msra.mxu0 %v431
        %534 = vmatprep.subr.mxu0 %v441
        %535 = vmatpush1.msra.mxu0 %v440
        %536 = vmatprep.subr.mxu0 %v448
        %537 = vmatpush1.msra.mxu0 %v447
        %538 = vmatprep.subr.mxu0 %v455
        %539 = vmatpush1.msra.mxu0 %v454
        %540 = vmatprep.subr.mxu0 %v462
        %541 = vmatpush1.msra.mxu0 %v461
        %542 = vmatprep.subr.mxu0 %v469
        %543 = vmatpush1.msra.mxu0 %v468
        %544 = vmatprep.subr.mxu0 %v476
        %545 = vmatpush1.msra.mxu0 %v475
        %546 = vmatprep.subr.mxu0 %v483
        %547 = vmatpush1.msra.mxu0 %v482
        %548 = vmatprep.subr.mxu0 %v490
        %549 = vmatpush1.msra.mxu0 %v489
        %550 = vmatprep.subr.mxu0 0.0
        %551 = vmatpush1.msra.mxu0 0.0
        %552 = vmatprep.subr.mxu0 0.0
        %553 = vmatpush1.msra.mxu0 0.0
        %554 = vmatprep.subr.mxu0 0.0
        %555 = vmatpush1.msra.mxu0 0.0
        %556 = vmatprep.subr.mxu0 0.0
        %557 = vmatpush1.msra.mxu0 0.0
        %558 = vmatprep.subr.mxu0 0.0
        %559 = vmatpush1.msra.mxu0 0.0
        %560 = vmatprep.subr.mxu0 0.0
        %561 = vmatpush1.msra.mxu0 0.0
        %562 = vmatprep.subr.mxu0 0.0
        %563 = vmatpush1.msra.mxu0 0.0
        %564 = vmatprep.subr.mxu0 0.0
        %565 = vmatpush1.msra.mxu0 0.0
        %566 = vmatprep.subr.mxu0 0.0
        %567 = vmatpush1.msra.mxu0 0.0
        %568 = vmatprep.subr.mxu0 0.0
        %569 = vmatpush1.msra.mxu0 0.0
        %570 = vmatprep.subr.mxu0 0.0
        %571 = vmatpush1.msra.mxu0 0.0
        %572 = vmatprep.subr.mxu0 0.0
        %573 = vmatpush1.msra.mxu0 0.0
        %574 = vmatprep.subr.mxu0 0.0
        %575 = vmatpush1.msra.mxu0 0.0
        %576 = vmatprep.subr.mxu0 0.0
        %577 = vmatpush1.msra.mxu0 0.0
        %578 = vmatprep.subr.mxu0 0.0
        %579 = vmatpush1.msra.mxu0 0.0
        %580 = vmatprep.subr.mxu0 0.0
        %581 = vmatpush1.msra.mxu0 0.0
        %582 = vmatprep.subr.mxu0 0.0
        %583 = vmatpush1.msra.mxu0 0.0
        %584 = vmatprep.subr.mxu0 0.0
        %585 = vmatpush1.msra.mxu0 0.0
        %586 = vmatprep.subr.mxu0 0.0
        %587 = vmatpush1.msra.mxu0 0.0
        %588 = vmatprep.subr.mxu0 0.0
        %589 = vmatpush1.msra.mxu0 0.0
        %590 = vmatprep.subr.mxu0 0.0
        %591 = vmatpush1.msra.mxu0 0.0
        %592 = vmatprep.subr.mxu0 0.0
        %593 = vmatpush1.msra.mxu0 0.0
        %594 = vmatprep.subr.mxu0 0.0
        %595 = vmatpush1.msra.mxu0 0.0
        %596 = vmatprep.mubr.f32.mxu0 0.0
        %597 = vmatmul.mubr.f32.gmra.mrb[0].mxu0 %v521
        %v598 = vpop.f32.mrb[0].mxu0
        %v599 = vadd.f32 %v502, %v598
        %v600 = vpop.f32.mrb[0].mxu0
        %v601 = vadd.f32 %v502, %v600
        %602 = vmatprep.mubr.f32.mxu0 0.0
        %603 = vmatmul.mubr.f32.gmra.mrb[0].mxu0 %v524
        %v604 = vpop.f32.mrb[0].mxu0
        %v605 = vadd.f32 %v507, %v604
        %v606 = vpop.f32.mrb[0].mxu0
        %v607 = vadd.f32 %v507, %v606
        %608 = vmatprep.mubr.f32.mxu0 0.0
        %609 = vmatmul.mubr.f32.gmra.mrb[0].mxu0 %v527
        %v610 = vpop.f32.mrb[0].mxu0
        %v611 = vadd.f32 %v512, %v610
        %v612 = vpop.f32.mrb[0].mxu0
        %v613 = vadd.f32 %v512, %v612
        %614 = vmatprep.mubr.f32.mxu0 0.0
        %615 = vmatmul.mubr.f32.gmra.mrb[0].mxu0 %v530
        %v616 = vpop.f32.mrb[0].mxu0
        %v617 = vadd.f32 %v517, %v616
        %v618 = vpop.f32.mrb[0].mxu0
        %v619 = vadd.f32 %v517, %v618
        %620 = vdwg.mxu0
        %v621 = vmax.f32 %v599, 0.0
        %v622 = vmax.f32 %v601, 0.0
        %v623 = vmax.f32 %v605, 0.0
        %v624 = vmax.f32 %v607, 0.0
        %v625 = vmax.f32 %v611, 0.0
        %v626 = vmax.f32 %v613, 0.0
        %v627 = vmax.f32 %v617, 0.0
        %v628 = vmax.f32 %v619, 0.0
        %v629 = vld [vmem:[%s5] sm:$0xff]
        %v630 = vld [vmem:[%s5 + $0x8] sm:$0xff]
        %v631 = vld [vmem:[%s5 + $0x10] sm:$0xff]
        %v632 = vld [vmem:[%s5 + $0x18] sm:$0xff]
        %v633 = vld [vmem:[%s6] sm:$0xff]
        %v634 = vld [vmem:[%s6 + $0x8] sm:$0xff]
        %v635 = vld [vmem:[%s6 + $0x10] sm:$0xff]
        %v636 = vld [vmem:[%s6 + $0x18] sm:$0xff]
        %638 = vset.pattern.permute.xlu0 0
        %639 = vperm.xlu0 %638, %v633
        %v640 = vpop.permute.xlu0 %639
        %643 = vset.pattern.permute.xlu0 0
        %644 = vperm.xlu0 %643, %v634
        %v645 = vpop.permute.xlu0 %644
        %648 = vset.pattern.permute.xlu0 0
        %649 = vperm.xlu0 %648, %v635
        %v650 = vpop.permute.xlu0 %649
        %653 = vset.pattern.permute.xlu0 0
        %654 = vperm.xlu0 %653, %v636
        %v655 = vpop.permute.xlu0 %654
        %vm657 = vcmask 261120
        %v659 = vsel %vm657, %v629, 0
        %v662 = vsel %vm657, %v630, 0
        %v665 = vsel %vm657, %v631, 0
        %v668 = vsel %vm657, %v632, 0
        %670 = vmatprep.subr.mxu0 %v622
        %671 = vmatpush1.msra.mxu0 %v621
        %672 = vmatprep.subr.mxu0 %v624
        %673 = vmatpush1.msra.mxu0 %v623
        %674 = vmatprep.subr.mxu0 %v626
        %675 = vmatpush1.msra.mxu0 %v625
        %676 = vmatprep.subr.mxu0 %v628
        %677 = vmatpush1.msra.mxu0 %v627
        %678 = vmatprep.subr.mxu0 0.0
        %679 = vmatpush1.msra.mxu0 0.0
        %680 = vmatprep.subr.mxu0 0.0
        %681 = vmatpush1.msra.mxu0 0.0
        %682 = vmatprep.subr.mxu0 0.0
        %683 = vmatpush1.msra.mxu0 0.0
        %684 = vmatprep.subr.mxu0 0.0
        %685 = vmatpush1.msra.mxu0 0.0
        %686 = vmatprep.subr.mxu0 0.0
        %687 = vmatpush1.msra.mxu0 0.0
        %688 = vmatprep.subr.mxu0 0.0
        %689 = vmatpush1.msra.mxu0 0.0
        %690 = vmatprep.subr.mxu0 0.0
        %691 = vmatpush1.msra.mxu0 0.0
        %692 = vmatprep.subr.mxu0 0.0
        %693 = vmatpush1.msra.mxu0 0.0
        %694 = vmatprep.subr.mxu0 0.0
        %695 = vmatpush1.msra.mxu0 0.0
        %696 = vmatprep.subr.mxu0 0.0
        %697 = vmatpush1.msra.mxu0 0.0
        %698 = vmatprep.subr.mxu0 0.0
        %699 = vmatpush1.msra.mxu0 0.0
        %700 = vmatprep.subr.mxu0 0.0
        %701 = vmatpush1.msra.mxu0 0.0
        %702 = vmatprep.subr.mxu0 0.0
        %703 = vmatpush1.msra.mxu0 0.0
        %704 = vmatprep.subr.mxu0 0.0
        %705 = vmatpush1.msra.mxu0 0.0
        %706 = vmatprep.subr.mxu0 0.0
        %707 = vmatpush1.msra.mxu0 0.0
        %708 = vmatprep.subr.mxu0 0.0
        %709 = vmatpush1.msra.mxu0 0.0
        %710 = vmatprep.subr.mxu0 0.0
        %711 = vmatpush1.msra.mxu0 0.0
        %712 = vmatprep.subr.mxu0 0.0
        %713 = vmatpush1.msra.mxu0 0.0
        %714 = vmatprep.subr.mxu0 0.0
        %715 = vmatpush1.msra.mxu0 0.0
        %716 = vmatprep.subr.mxu0 0.0
        %717 = vmatpush1.msra.mxu0 0.0
        %718 = vmatprep.subr.mxu0 0.0
        %719 = vmatpush1.msra.mxu0 0.0
        %720 = vmatprep.subr.mxu0 0.0
        %721 = vmatpush1.msra.mxu0 0.0
        %722 = vmatprep.subr.mxu0 0.0
        %723 = vmatpush1.msra.mxu0 0.0
        %724 = vmatprep.subr.mxu0 0.0
        %725 = vmatpush1.msra.mxu0 0.0
        %726 = vmatprep.subr.mxu0 0.0
        %727 = vmatpush1.msra.mxu0 0.0
        %728 = vmatprep.subr.mxu0 0.0
        %729 = vmatpush1.msra.mxu0 0.0
        %730 = vmatprep.subr.mxu0 0.0
        %731 = vmatpush1.msra.mxu0 0.0
        %732 = vmatprep.subr.mxu0 0.0
        %733 = vmatpush1.msra.mxu0 0.0
        %734 = vmatprep.mubr.f32.mxu0 0.0
        %735 = vmatmul.mubr.f32.gmra.mrb[0].mxu0 %v659
        %v736 = vpop.f32.mrb[0].mxu0
        %v737 = vadd.f32 %v640, %v736
        %v738 = vpop.f32.mrb[0].mxu0
        %v739 = vadd.f32 %v640, %v738
        %740 = vmatprep.mubr.f32.mxu0 0.0
        %741 = vmatmul.mubr.f32.gmra.mrb[0].mxu0 %v662
        %v742 = vpop.f32.mrb[0].mxu0
        %v743 = vadd.f32 %v645, %v742
        %v744 = vpop.f32.mrb[0].mxu0
        %v745 = vadd.f32 %v645, %v744
        %746 = vmatprep.mubr.f32.mxu0 0.0
        %747 = vmatmul.mubr.f32.gmra.mrb[0].mxu0 %v665
        %v748 = vpop.f32.mrb[0].mxu0
        %v749 = vadd.f32 %v650, %v748
        %v750 = vpop.f32.mrb[0].mxu0
        %v751 = vadd.f32 %v650, %v750
        %752 = vmatprep.mubr.f32.mxu0 0.0
        %753 = vmatmul.mubr.f32.gmra.mrb[0].mxu0 %v668
        %v754 = vpop.f32.mrb[0].mxu0
        %v755 = vadd.f32 %v655, %v754
        %v756 = vpop.f32.mrb[0].mxu0
        %v757 = vadd.f32 %v655, %v756
        %758 = vdwg.mxu0
        %v759 = vmax.f32 %v737, 0.0
        %v760 = vmax.f32 %v739, 0.0
        %v761 = vmax.f32 %v743, 0.0
        %v762 = vmax.f32 %v745, 0.0
        %v763 = vmax.f32 %v749, 0.0
        %v764 = vmax.f32 %v751, 0.0
        %v765 = vmax.f32 %v755, 0.0
        %v766 = vmax.f32 %v757, 0.0
        %v767 = vld [vmem:[%s7] sm:$0xff]
        %v768 = vld [vmem:[%s8] sm:$0xff]
        %770 = vset.pattern.permute.xlu0 0
        %771 = vperm.xlu0 %770, %v768
        %v772 = vpop.permute.xlu0 %771
        %v775 = vsel %vm657, %v767, 0
        %777 = vmatprep.subr.mxu0 %v760
        %778 = vmatpush1.msra.mxu0 %v759
        %779 = vmatprep.subr.mxu0 %v762
        %780 = vmatpush1.msra.mxu0 %v761
        %781 = vmatprep.subr.mxu0 %v764
        %782 = vmatpush1.msra.mxu0 %v763
        %783 = vmatprep.subr.mxu0 %v766
        %784 = vmatpush1.msra.mxu0 %v765
        %785 = vmatprep.subr.mxu0 0.0
        %786 = vmatpush1.msra.mxu0 0.0
        %787 = vmatprep.subr.mxu0 0.0
        %788 = vmatpush1.msra.mxu0 0.0
        %789 = vmatprep.subr.mxu0 0.0
        %790 = vmatpush1.msra.mxu0 0.0
        %791 = vmatprep.subr.mxu0 0.0
        %792 = vmatpush1.msra.mxu0 0.0
        %793 = vmatprep.subr.mxu0 0.0
        %794 = vmatpush1.msra.mxu0 0.0
        %795 = vmatprep.subr.mxu0 0.0
        %796 = vmatpush1.msra.mxu0 0.0
        %797 = vmatprep.subr.mxu0 0.0
        %798 = vmatpush1.msra.mxu0 0.0
        %799 = vmatprep.subr.mxu0 0.0
        %800 = vmatpush1.msra.mxu0 0.0
        %801 = vmatprep.subr.mxu0 0.0
        %802 = vmatpush1.msra.mxu0 0.0
        %803 = vmatprep.subr.mxu0 0.0
        %804 = vmatpush1.msra.mxu0 0.0
        %805 = vmatprep.subr.mxu0 0.0
        %806 = vmatpush1.msra.mxu0 0.0
        %807 = vmatprep.subr.mxu0 0.0
        %808 = vmatpush1.msra.mxu0 0.0
        %809 = vmatprep.subr.mxu0 0.0
        %810 = vmatpush1.msra.mxu0 0.0
        %811 = vmatprep.subr.mxu0 0.0
        %812 = vmatpush1.msra.mxu0 0.0
        %813 = vmatprep.subr.mxu0 0.0
        %814 = vmatpush1.msra.mxu0 0.0
        %815 = vmatprep.subr.mxu0 0.0
        %816 = vmatpush1.msra.mxu0 0.0
        %817 = vmatprep.subr.mxu0 0.0
        %818 = vmatpush1.msra.mxu0 0.0
        %819 = vmatprep.subr.mxu0 0.0
        %820 = vmatpush1.msra.mxu0 0.0
        %821 = vmatprep.subr.mxu0 0.0
        %822 = vmatpush1.msra.mxu0 0.0
        %823 = vmatprep.subr.mxu0 0.0
        %824 = vmatpush1.msra.mxu0 0.0
        %825 = vmatprep.subr.mxu0 0.0
        %826 = vmatpush1.msra.mxu0 0.0
        %827 = vmatprep.subr.mxu0 0.0
        %828 = vmatpush1.msra.mxu0 0.0
        %829 = vmatprep.subr.mxu0 0.0
        %830 = vmatpush1.msra.mxu0 0.0
        %831 = vmatprep.subr.mxu0 0.0
        %832 = vmatpush1.msra.mxu0 0.0
        %833 = vmatprep.subr.mxu0 0.0
        %834 = vmatpush1.msra.mxu0 0.0
        %835 = vmatprep.subr.mxu0 0.0
        %836 = vmatpush1.msra.mxu0 0.0
        %837 = vmatprep.subr.mxu0 0.0
        %838 = vmatpush1.msra.mxu0 0.0
        %839 = vmatprep.subr.mxu0 0.0
        %840 = vmatpush1.msra.mxu0 0.0
        %841 = vmatprep.mubr.f32.mxu0 0.0
        %842 = vmatmul.mubr.f32.gmra.mrb[0].mxu0 %v775
        %v843 = vpop.f32.mrb[0].mxu0
        %v844 = vadd.f32 %v772, %v843
        %v845 = vpop.f32.mrb[0].mxu0
        %v846 = vadd.f32 %v772, %v845
        %847 = vdwg.mxu0
        %v848 = vxor.u32 %v844, 2147483648
        %v849 = vxor.u32 %v846, 2147483648
        %v850 = vmul.f32 %v848, 1.442695
        %v851 = vpow.pop %v850
        %v852 = vmul.f32 %v849, 1.442695
        %v853 = vpow.pop %v852
        %v854 = vadd.f32 %v851, 1.0
        %v855 = vadd.f32 %v853, 1.0
        %v856 = vrcp.pop %v854
        %v857 = vmul.f32 1.0, %v856
        %v858 = vrcp.pop %v855
        %v859 = vmul.f32 1.0, %v858
        %v860 = vld [vmem:[%s2] sm:$0x3]
        %v863 = vcombine.low %v857, %v859
        %865 = vst [vmem:[%s394] sm:$0xff] %v863
        %v866 = vrot.slane %v857, 4
        %v867 = vrot.slane %v859, 4
        %870 = vrot.lane.b32.xlu0 %v866, 17
        %v871 = vpop.permute.xlu0 %870
        %872 = vrot.lane.b32.xlu0 %v867, 17
        %v873 = vpop.permute.xlu0 %872
        %vm874 = vcmp.lt.s32.totalorder %v438, 17
        %v875 = vsel %vm874, %v871, %v873
        %v876 = vsel %vm874, %v873, %v871
        %v878 = vlaneseq
        %v879 = vshrl.u32 %v878, 7
        %v880 = vsub.s32 0, %v879
        %v881 = vrot.slane %v860, %v880
        %v882 = vlaneseq
        %v883 = vshrl.u32 %v882, 7
        %v884 = vsub.s32 1, %v883
        %v885 = vrot.slane %v860, %v884
        %v888 = vmul.f32 %v876, %v881
        %v889 = vmul.f32 %v875, %v885
        %v892 = vcombine.low %v888, %v889
        %v894 = vunpack.c.l.s4 1983009808
        %v895 = vunpack.c.0.s8 %v894
        %v896 = vlaneseq
        %v897 = vshrl.u32 %v896, 7
        %v898 = vsub.s32 %v895, %v897
        %v899 = vrot.slane %v892, %v898
        %901 = vst [vmem:[%s401] sm:$0xf] %v899
        %s902 = sand.u32 %s238, 1
        %s903 = scalar_lea.sflag [#allocation4], %s902
        %s904 = sand.u32 %s238, 1
        %s905 = smul.addr %s904, 8
        %s906 = scalar_lea.vmem [#allocation5], %s905
        %s907 = sand.u32 %s264, 1
        %s908 = scalar_lea.sflag [#allocation7], %s907
        %s909 = sand.u32 %s264, 1
        %s910 = smul.addr %s909, 4
        %s911 = scalar_lea.vmem [#allocation6], %s910
        // Predicated region
        $region61: #{_nca_step.1} parent=55 // pred_check
          %p912 = pneg %p248
        $region62: #{_nca_step.1} parent=55 // pred_check_branch
          %914 = sbr.rel (%p912) target = $region64
        $region63: #{_nca_step.1} parent=55 // pred_region
          %s916 = ssub.s32 128, 128
          %917 = vsyncadd %s903, %s916
          %s918 = smul.addr %s31, 2
          %s919 = smul.addr %s918, 64
          %s920 = scalar_lea.hbm %s9, %s919
          %s922 = sshll.u32 %s906, 4
          %s923 = int_to_ptr.vmem [resolvable:$true] %s922
          %925 = dma.vmem_to_hbm [thread:$0]  %s923, 128, %s920, %s903
        $region64: #{_nca_step.1} parent=55 // pred_fallthru
          _
        // Predicated region
        $region65: #{_nca_step.1} parent=55 // pred_check
          %p926 = pneg %p274
        $region66: #{_nca_step.1} parent=55 // pred_check_branch
          %928 = sbr.rel (%p926) target = $region68
        $region67: #{_nca_step.1} parent=55 // pred_region
          %s930 = ssub.s32 64, 64
          %931 = vsyncadd %s908, %s930
          %s932 = smul.addr %s31, 2
          %s933 = smul.addr %s932, 32
          %s934 = scalar_lea.hbm %s10, %s933
          %s936 = sshll.u32 %s911, 4
          %s937 = int_to_ptr.vmem [resolvable:$true] %s936
          %939 = dma.vmem_to_hbm [thread:$0]  %s937, 64, %s934, %s908
        $region68: #{_nca_step.1} parent=55 // pred_fallthru
          _
      $region56: #{_nca_step.1} parent=5 // pred_fallthru
        _
      %p940 = scmp.le.s32.totalorder 2, %s26
      // Predicated region
      $region69: #{_nca_step.1} parent=5 // pred_check
        %p941 = pneg %p940
      $region70: #{_nca_step.1} parent=5 // pred_check_branch
        %943 = sbr.rel (%p941) target = $region72
      $region71: #{_nca_step.1} parent=5 // pred_region
        %s944 = ssub.s32 %s26, 2
        // Predicated region
        $region73: #{_nca_step.1} parent=71 // pred_check
          %p945 = pneg %p254
        $region74: #{_nca_step.1} parent=71 // pred_check_branch
          %947 = sbr.rel (%p945) target = $region76
        $region75: #{_nca_step.1} parent=71 // pred_region
          %s948 = sand.u32 %s239, 1
          %s949 = scalar_lea.sflag [#allocation4], %s948
          %s950 = sand.u32 %s239, 1
          %s951 = smul.addr %s950, 8
          %s952 = scalar_lea.vmem [#allocation5], %s951
          %953 = dma.done %s949, 128
        $region76: #{_nca_step.1} parent=71 // pred_fallthru
          _
        // Predicated region
        $region77: #{_nca_step.1} parent=71 // pred_check
          %p954 = pneg %p280
        $region78: #{_nca_step.1} parent=71 // pred_check_branch
          %956 = sbr.rel (%p954) target = $region80
        $region79: #{_nca_step.1} parent=71 // pred_region
          %s957 = sand.u32 %s265, 1
          %s958 = scalar_lea.sflag [#allocation7], %s957
          %s959 = sand.u32 %s265, 1
          %s960 = smul.addr %s959, 4
          %s961 = scalar_lea.vmem [#allocation6], %s960
          %962 = dma.done %s958, 64
        $region80: #{_nca_step.1} parent=71 // pred_fallthru
          _
      $region72: #{_nca_step.1} parent=5 // pred_fallthru
        _
    $region6: #{_nca_step.1} parent=1 // loop_footer
      %s30 = sadd.s32 1, %s26
    $region7: #{_nca_step.1} parent=1 // loop_footer_branch
      %25 = sbr.rel target = $region3
    $region8: #{_nca_step.1} parent=1 // loop_exit
      _
    %963 = vsyncpa [#allocation3], 1
    %s964 = scalar_lea.sflag [#allocation3], 1
    %965 = vsyncpa %s964, 1
    %966 = vsyncpa [#allocation4], 1
    %s967 = scalar_lea.sflag [#allocation4], 1
    %968 = vsyncpa %s967, 1
    %969 = vsyncpa [#allocation7], 1
    %s970 = scalar_lea.sflag [#allocation7], 1
    %971 = vsyncpa %s970, 1

</llo_original>
